<compile_context>
chip_gen: v7x
topology: tpu7x:2x2x1
jax: 0.10.0
libtpu: 0.0.40
codegen_flags: <defaults>
</compile_context>

<pallas_src>
import math
import functools

import jax
import jax.numpy as jnp
from jax.experimental import pallas as pl
from jax.experimental.pallas import tpu as pltpu


def make_pe_table(d_model: int, max_len: int) -> jnp.ndarray:
    """Deterministic sinusoidal table, shape (max_len, d_model), float32.

    Matches the torch construction: pe[:, 0::2] = sin, pe[:, 1::2] = cos
    (assumes even d_model, as the torch module does).
    """
    position = jnp.arange(0, max_len, dtype=jnp.float32)[:, None]            # (L, 1)
    div_term = jnp.exp(
        jnp.arange(0, d_model, 2, dtype=jnp.float32)
        * -(math.log(10000.0) / d_model)
    )                                                                         # (D/2,)
    args = position * div_term                                                # (L, D/2)
    pe = jnp.stack([jnp.sin(args), jnp.cos(args)], axis=-1).reshape(max_len, d_model)
    return pe


def _pos_enc_kernel(x_ref, pe_ref, o_ref, *, xscale: float):
    # x block: (tB, tN) in x.dtype; pe block: (1, tN) f32, broadcast over rows.
    x = x_ref[...].astype(jnp.float32)
    o_ref[...] = (x * xscale + pe_ref[...]).astype(o_ref.dtype)


def _round_down(v: int, m: int) -> int:
    return (v // m) * m


def _vmem_budget_bytes() -> int:
    """Total-resident-VMEM target for the pipelined buffers, per generation."""
    try:
        kind = jax.devices()[0].device_kind.lower()
    except Exception:
        kind = ""
    if "v5 lite" in kind or "v5lite" in kind or "v5e" in kind:
        return 12 << 20   # v5e: keep blocks ~2 MiB, modest scoped-VMEM bump only
    # v6e (128 MiB VMEM, 32 MiB scoped default) and v7x (64 MiB VMEM):
    # ~3-4 MiB x/out blocks, total well inside the 32 MiB scoped default.
    return 22 << 20


def _choose_tiles(B: int, N: int, x_itemsize: int, budget_bytes: int):
    """Pick (tB, tN) row/lane tiles.  tB is sublane-pack aware; tN is a multiple
    of 128 (or the full N when N < 128) sized so that double-buffered x-in, out
    and the sublane-padded f32 pe buffer all fit in `budget_bytes`."""
    pack = max(1, 4 // x_itemsize)            # sublane packing factor per 32-bit word
    row_tile = 8 * pack                       # 8 rows f32, 16 bf16, 32 int8/fp8
    tB = B if B <= row_tile else row_tile     # == full dim or a multiple of 8

    if N <= 128:
        # Last block dim must be a multiple of 128 or equal the full array dim.
        return tB, N

    # Resident bytes per lane element:
    #   2 x-in buffers + 2 out buffers (x dtype, tB rows)
    # + 2 pe buffers ((1, tN) f32, padded to 8 sublanes in VMEM -> 8x raw bytes).
    per_lane = 2 * (2 * tB * x_itemsize) + 2 * 8 * 4
    tN = _round_down(budget_bytes // per_lane, 128)
    cap = _round_down(N, 128)                 # largest 128-multiple <= N (>= 128 here)
    tN = max(128, min(tN, cap))

    # v7x has 2 TensorCores: avoid a degenerate (1, 1) grid when we can split
    # the lane axis instead (costs nothing for a bandwidth-bound elementwise op).
    if B <= tB and tN >= N and N >= 256:
        tN = max(128, _round_down((N + 1) // 2, 128))

    return tB, tN


def positional_encoding_forward(x: jnp.ndarray,
                                pe_table: jnp.ndarray,
                                offset: int = 0,
                                *,
                                min_pallas_bytes: int = 1 << 20):
    """Mirrors PositionalEncoding.forward for int / scalar offset (eval mode).

    x: (B, T, D); pe_table: (max_len, D) float32.
    Returns (x * sqrt(D) + pos_emb) in x.dtype and pos_emb (1, T, D) in f32.
    """
    B, T, D = x.shape
    xscale = math.sqrt(D)

    if isinstance(offset, int):
        assert offset + T <= pe_table.shape[0]
    pos_emb = jax.lax.dynamic_slice(pe_table, (offset, 0), (T, D))            # (T, D) f32

    itemsize = jnp.dtype(x.dtype).itemsize

    # Small-problem fallback: launch + per-grid-step overhead dominates below ~1 MiB;
    # a plain XLA fusion is strictly faster there.
    if B * T * D * itemsize < min_pallas_bytes:
        out_x = (x.astype(jnp.float32) * xscale + pos_emb[None]).astype(x.dtype)
        return out_x, pos_emb[None]

    # Lane-dense 2D layout: the pe broadcast is only over batch, so flattening
    # (T, D) -> (T*D,) is free layout plumbing and gives full-width stores.
    N = T * D
    x2 = x.reshape(B, N)
    pe2 = pos_emb.reshape(1, N)               # stays f32 for precision

    tB, tN = _choose_tiles(B, N, itemsize, _vmem_budget_bytes())

    # Lane axis OUTER, batch axis INNER: the pe block index is constant across the
    # inner sweep, so Pallas keeps it resident instead of re-fetching per batch tile.
    grid = (pl.cdiv(N, tN), pl.cdiv(B, tB))

    # Explicit VMEM need (double-buffered x-in + out, plus the (1, tN) f32 pe block
    # which is padded to 8 sublanes in VMEM).  Set the scoped limit to cover it so
    # v5e's 16 MiB default never forces smaller tiles; stays below v7x's 64 MiB.
    need = 2 * 2 * tB * tN * itemsize + 2 * 8 * tN * 4
    vmem_limit = int(min(max(need + (4 << 20), 16 << 20), 40 << 20))

    kernel = functools.partial(_pos_enc_kernel, xscale=xscale)

    out2 = pl.pallas_call(
        kernel,
        out_shape=jax.ShapeDtypeStruct((B, N), x.dtype),
        grid_spec=pltpu.PrefetchScalarGridSpec(
            num_scalar_prefetch=0,
            grid=grid,
            in_specs=[
                pl.BlockSpec((tB, tN), lambda n, b: (b, n)),   # x rows/lanes
                pl.BlockSpec((1, tN), lambda n, b: (0, n)),    # pe: shared over batch
            ],
            out_specs=pl.BlockSpec((tB, tN), lambda n, b: (b, n)),
        ),
        compiler_params=pltpu.CompilerParams(
            # Every output block is written exactly once -> both axes parallel
            # (shards across both TensorCores on v7x; harmless on v5e/v6e).
            dimension_semantics=("parallel", "parallel"),
            vmem_limit_bytes=vmem_limit,
        ),
    )(x2, pe2)

    out_x = out2.reshape(B, T, D)

    # pos_emb is returned from the wrapper-side slice: full f32 precision, no
    # redundant kernel output or extra HBM writeback.
    # TODO(synk): tensor-valued per-example `offset` (the F.embedding gather path)
    # would use PrefetchScalarGridSpec(num_scalar_prefetch=1) with an offset-indexed
    # pe index_map; only int / scalar offsets are implemented here.
    return out_x, pos_emb[None]


if __name__ == "__main__":
    # ---- Test 1: module-scale small shape, forced through the Pallas kernel ----
    B, T, D = 2, 8, 32
    max_len = 64
    offset = 3

    key = jax.random.PRNGKey(0)
    x = jax.random.normal(key, (B, T, D), dtype=jnp.float32)
    pe_table = make_pe_table(D, max_len)

    out_x, out_pe = positional_encoding_forward(
        x, pe_table, offset=offset, min_pallas_bytes=0)
    out_x = jax.block_until_ready(out_x)
    out_pe = jax.block_until_ready(out_pe)

    ref_pe = pe_table[offset:offset + T][None]
    ref_x = x * math.sqrt(D) + ref_pe
    assert jnp.allclose(out_x, ref_x, atol=1e-5), "x output mismatch (pallas path)"
    assert jnp.allclose(out_pe, ref_pe, atol=1e-6), "pos_emb output mismatch"

    # ---- Test 2: same shape via the small-problem XLA fallback (default path) ----
    out_x2, out_pe2 = positional_encoding_forward(x, pe_table, offset=offset)
    out_x2 = jax.block_until_ready(out_x2)
    assert jnp.allclose(out_x2, ref_x, atol=1e-5), "x output mismatch (fallback path)"
    assert jnp.allclose(out_pe2, ref_pe, atol=1e-6), "pos_emb mismatch (fallback path)"

    # ---- Test 3: bf16 input, non-multiple-of-128 lane extent, multi-block grid ----
    B2, T2, D2 = 16, 50, 96          # N = 4800 -> partial last lane block (robust cdiv tiling)
    x_b = jax.random.normal(jax.random.PRNGKey(1), (B2, T2, D2), dtype=jnp.bfloat16)
    pe_table2 = make_pe_table(D2, 128)
    off2 = 5
    out_x3, out_pe3 = positional_encoding_forward(
        x_b, pe_table2, offset=off2, min_pallas_bytes=0)
    out_x3 = jax.block_until_ready(out_x3)

    ref_pe3 = pe_table2[off2:off2 + T2][None]
    ref_x3 = (x_b.astype(jnp.float32) * math.sqrt(D2) + ref_pe3).astype(jnp.bfloat16)
    assert jnp.allclose(out_x3.astype(jnp.float32), ref_x3.astype(jnp.float32),
                        atol=2e-2, rtol=2e-2), "x output mismatch (bf16 path)"
    assert jnp.allclose(out_pe3, ref_pe3, atol=1e-6), "pos_emb mismatch (bf16 path)"

    print("KERNEL_OK")
</pallas_src>

<mosaic_0001>
module attributes {stable_mosaic.version = 11 : i64} {
  func.func @_pos_enc_kernel(%arg0: i32, %arg1: i32, %arg2: memref<2x128xf32, #tpu.memory_space<vmem>>, %arg3: memref<1x128xf32, #tpu.memory_space<vmem>>, %arg4: memref<2x128xf32, #tpu.memory_space<vmem>>) attributes {dimension_semantics = [#tpu.dimension_semantics<parallel>, #tpu.dimension_semantics<parallel>], iteration_bounds = array<i64: 2, 1>, scalar_prefetch = 0 : i64, scratch_operands = 0 : i64, tpu.core_type = #tpu.core_type<tc>, window_params = [{transform_indices = @transform_0, window_bounds = array<i64: 2, 128>}, {transform_indices = @transform_1, window_bounds = array<i64: 1, 128>}, {transform_indices = @transform_2, window_bounds = array<i64: 2, 128>}]} {
    %c0 = arith.constant 0 : index
    %c0_0 = arith.constant 0 : index
    %0 = vector.load %arg2[%c0, %c0_0] : memref<2x128xf32, #tpu.memory_space<vmem>>, vector<2x128xf32>
    %cst = arith.constant 5.65685415 : f32
    %1 = vector.broadcast %cst : f32 to vector<2x128xf32>
    %2 = arith.mulf %0, %1 : vector<2x128xf32>
    %c0_1 = arith.constant 0 : index
    %c0_2 = arith.constant 0 : index
    %3 = vector.load %arg3[%c0_1, %c0_2] : memref<1x128xf32, #tpu.memory_space<vmem>>, vector<1x128xf32>
    %4 = vector.broadcast %3 : vector<1x128xf32> to vector<2x128xf32>
    %5 = arith.addf %2, %4 : vector<2x128xf32>
    %c0_3 = arith.constant 0 : index
    %c0_4 = arith.constant 0 : index
    %6 = vector.load %arg4[%c0_3, %c0_4] : memref<2x128xf32, #tpu.memory_space<vmem>>, vector<2x128xf32>
    tpu.vector_store %arg4[%c0_3, %c0_4], %5 {strides = array<i32>} : memref<2x128xf32, #tpu.memory_space<vmem>>, vector<2x128xf32>,
    return
  }
  func.func @transform_0(%arg0: i32, %arg1: i32) -> (i32, i32) {
    %c0_i32 = arith.constant 0 : i32
    return %arg1, %arg0 : i32, i32
  }
  func.func @transform_1(%arg0: i32, %arg1: i32) -> (i32, i32) {
    %c0_i32 = arith.constant 0 : i32
    %c0_i32_0 = arith.constant 0 : i32
    return %c0_i32, %arg0 : i32, i32
  }
  func.func @transform_2(%arg0: i32, %arg1: i32) -> (i32, i32) {
    %c0_i32 = arith.constant 0 : i32
    return %arg1, %arg0 : i32, i32
  }
}

</mosaic_0001>

<llo_original>
// kernel: tpu_custom_call.1
$region0: #{tpu_custom_call.1}
  #allocation0 [shape = 'u32[]', space=smem, size = 0x4, offset = 0x4, fixed_abs, tag = 'smem constant byte address 0x4 - core index']
  #allocation1 [shape = 'u32[144,128]{1,0:T(1,128)}', space=vmem, size = 0x12000, scoped, tag = 'internal scratch']
  %s0 = inlined_call_operand.hbm [shape: f32[2,256], index: 0, kind: input, shape index: {}]
  %s1 = inlined_call_operand.vmem [shape: f32[1,256], index: 1, kind: input, shape index: {}]
  %s2 = inlined_call_operand.hbm [shape: f32[2,256], index: 2, kind: output, shape index: {}]
  %s3 = sld [smem:[#allocation0]]
  $region45: #{tpu_custom_call.1} parent=0
    _
  %s5 = ssub.s32 1, %s3
  %s6 = scalar_select 0, %s5, %s3
  $region1: #{tpu_custom_call.1} parent=0
    #allocation2 [shape = 'u8[2048]{0}', space=vmem, size = 0x800, scoped, tag = 'input window, operand 0']
    #allocation3 [shape = 's32[2]{0}', space=sflag, size = 0x8, scoped, tag = 'scoped memory for tpu_custom_call.1']
    #allocation4 [shape = 's32[2]{0}', space=sflag, size = 0x8, scoped, tag = 'scoped memory for tpu_custom_call.1']
    #allocation5 [shape = 'u8[2048]{0}', space=vmem, size = 0x800, scoped, tag = 'output window, operand 0']
    %7 = vsyncpa [#allocation3], 0
    %s8 = scalar_lea.sflag [#allocation3], 1
    %9 = vsyncpa %s8, 0
    %10 = vsyncpa [#allocation4], 0
    %s11 = scalar_lea.sflag [#allocation4], 1
    %12 = vsyncpa %s11, 0
    loop: start=0, step=1, limit=4
    $region2: #{tpu_custom_call.1} parent=1 // loop_pre_header
      _
    $region3: #{tpu_custom_call.1} parent=1 // loop_header
      %s14 = sphi 0, %s18
      %p15 = scmp.ge.s32.totalorder %s14, 4
      %s21 = sphi 0, %s33
      %s22 = sphi 0, %s29
      %s23 = sphi 0, %s21
      %s24 = sphi 0, %s22
      %s25 = sphi 0, %s23
      %s26 = sphi 0, %s24
      %s38 = sphi 0, %s40
      %s41 = sphi 0, %s38
      %s42 = sphi 0, %s41
      %s58 = sphi 0, %s42
      %s64 = sphi 0, %s66
      %s67 = sphi 0, %s64
      %s68 = sphi 0, %s67
      %s84 = sphi 0, %s68
      %s92 = sphi 0, %s94
      %s95 = sphi 0, %s92
      %s96 = sphi 0, %s95
      %s112 = sphi 0, %s96
    $region4: #{tpu_custom_call.1} parent=1 // loop_header_branch
      %17 = sbr.rel (%p15) target = $region8
    $region5: #{tpu_custom_call.1} parent=1 // loop_body
      %s19 = ssub.s32 %s14, 1
      %s20 = ssub.s32 %s14, 2
      %s27 = sadd.s32 1, %s22
      %p28 = scmp.ge.s32.totalorder %s27, 1
      %s29 = scalar_select %p28, 0, %s27
      %s30 = sadd.s32 1, %s21
      %s31 = scalar_select %p28, %s30, %s21
      %p32 = scmp.ge.s32.totalorder %s31, 2
      %s33 = scalar_select %p32, 0, %s31
      %s34 = ssub.s32 %s22, %s29
      %s35 = ssub.s32 %s21, %s33
      %s36 = sor.u32 %s34, %s35
      %p37 = scmp.eq.s32.totalorder %s36, 0
      %s39 = sadd.s32 %s38, 1
      %s40 = scalar_select %p37, %s38, %s39
      %p43 = pneg %p37
      %p44 = scmp.eq.s32.totalorder %s14, 1
      %p45 = por %p43, %p44
      %p46 = scmp.ne.s32.totalorder %s38, %s41
      %p47 = scmp.eq.s32.totalorder %s14, 0
      %p48 = por %p46, %p47
      %p49 = scmp.ne.s32.totalorder %s38, %s41
      %p50 = scmp.eq.s32.totalorder %s19, 1
      %p51 = por %p49, %p50
      %p52 = scmp.ne.s32.totalorder %s41, %s42
      %p53 = scmp.eq.s32.totalorder %s19, 0
      %p54 = por %p52, %p53
      %p55 = scmp.ne.s32.totalorder %s41, %s42
      %p56 = scmp.eq.s32.totalorder %s20, 1
      %p57 = por %p55, %p56
      %p59 = scmp.ne.s32.totalorder %s42, %s58
      %p60 = scmp.eq.s32.totalorder %s20, 0
      %p61 = por %p59, %p60
      %s62 = ssub.s32 %s21, %s33
      %p63 = scmp.eq.s32.totalorder %s62, 0
      %s65 = sadd.s32 %s64, 1
      %s66 = scalar_select %p63, %s64, %s65
      %p69 = pneg %p63
      %p70 = scmp.eq.s32.totalorder %s14, 1
      %p71 = por %p69, %p70
      %p72 = scmp.ne.s32.totalorder %s64, %s67
      %p73 = scmp.eq.s32.totalorder %s14, 0
      %p74 = por %p72, %p73
      %p75 = scmp.ne.s32.totalorder %s64, %s67
      %p76 = scmp.eq.s32.totalorder %s19, 1
      %p77 = por %p75, %p76
      %p78 = scmp.ne.s32.totalorder %s67, %s68
      %p79 = scmp.eq.s32.totalorder %s19, 0
      %p80 = por %p78, %p79
      %p81 = scmp.ne.s32.totalorder %s67, %s68
      %p82 = scmp.eq.s32.totalorder %s20, 1
      %p83 = por %p81, %p82
      %p85 = scmp.ne.s32.totalorder %s68, %s84
      %p86 = scmp.eq.s32.totalorder %s20, 0
      %p87 = por %p85, %p86
      %s88 = ssub.s32 %s22, %s29
      %s89 = ssub.s32 %s21, %s33
      %s90 = sor.u32 %s88, %s89
      %p91 = scmp.eq.s32.totalorder %s90, 0
      %s93 = sadd.s32 %s92, 1
      %s94 = scalar_select %p91, %s92, %s93
      %p97 = pneg %p91
      %p98 = scmp.eq.s32.totalorder %s14, 1
      %p99 = por %p97, %p98
      %p100 = scmp.ne.s32.totalorder %s92, %s95
      %p101 = scmp.eq.s32.totalorder %s14, 0
      %p102 = por %p100, %p101
      %p103 = scmp.ne.s32.totalorder %s92, %s95
      %p104 = scmp.eq.s32.totalorder %s19, 1
      %p105 = por %p103, %p104
      %p106 = scmp.ne.s32.totalorder %s95, %s96
      %p107 = scmp.eq.s32.totalorder %s19, 0
      %p108 = por %p106, %p107
      %p109 = scmp.ne.s32.totalorder %s95, %s96
      %p110 = scmp.eq.s32.totalorder %s20, 1
      %p111 = por %p109, %p110
      %p113 = scmp.ne.s32.totalorder %s96, %s112
      %p114 = scmp.eq.s32.totalorder %s20, 0
      %p115 = por %p113, %p114
      %p116 = scmp.le.s32.totalorder 1, %s14
      %p117 = scmp.lt.s32.totalorder %s14, 3
      %p118 = pnand %p116, %p117
      %p119 = pneg %p118
      // Predicated region
      $region9: #{tpu_custom_call.1} parent=5 // pred_check
        _
      $region10: #{tpu_custom_call.1} parent=5 // pred_check_branch
        %121 = sbr.rel (%p118) target = $region12
      $region11: #{tpu_custom_call.1} parent=5 // pred_region
        %s122 = ssub.s32 %s14, 1
      $region12: #{tpu_custom_call.1} parent=5 // pred_fallthru
        _
      %p123 = scmp.lt.s32.totalorder %s14, 2
      // Predicated region
      $region13: #{tpu_custom_call.1} parent=5 // pred_check
        %p124 = pneg %p123
      $region14: #{tpu_custom_call.1} parent=5 // pred_check_branch
        %126 = sbr.rel (%p124) target = $region16
      $region15: #{tpu_custom_call.1} parent=5 // pred_region
        // Predicated region
        $region17: #{tpu_custom_call.1} parent=15 // pred_check
          %p127 = pneg %p48
        $region18: #{tpu_custom_call.1} parent=15 // pred_check_branch
          %129 = sbr.rel (%p127) target = $region20
        $region19: #{tpu_custom_call.1} parent=15 // pred_region
          %s130 = sand.u32 %s38, 1
          %s131 = scalar_lea.sflag [#allocation3], %s130
          %s132 = sand.u32 %s38, 1
          %s133 = smul.addr %s132, 2
          %s134 = scalar_lea.vmem [#allocation2], %s133
          %s136 = ssub.s32 32, 32
          %137 = vsyncadd %s131, %s136
          %s138 = smul.addr %s22, 2
          %s139 = sadd.s32 %s21, %s138
          %s140 = smul.addr %s139, 32
          %s141 = scalar_lea.hbm %s0, %s140
          %s143 = sshll.u32 %s134, 4
          %s144 = int_to_ptr.vmem [resolvable:$true] %s143
          %146 = dma.hbm_to_vmem [thread:$0]  %s141, 32, %s144, %s131
        $region20: #{tpu_custom_call.1} parent=15 // pred_fallthru
          _
        // Predicated region
        $region21: #{tpu_custom_call.1} parent=15 // pred_check
          %p147 = pneg %p74
        $region22: #{tpu_custom_call.1} parent=15 // pred_check_branch
          %149 = sbr.rel (%p147) target = $region24
        $region23: #{tpu_custom_call.1} parent=15 // pred_region
          %p150 = scmp.lt.s32.totalorder %s21, 1
          %s151 = scalar_select %p150, %s21, 1
          %s152 = scalar_lea.vmem %s1, %s151
        $region24: #{tpu_custom_call.1} parent=15 // pred_fallthru
          _
      $region16: #{tpu_custom_call.1} parent=5 // pred_fallthru
        _
      %p153 = scmp.le.s32.totalorder 1, %s14
      %p154 = scmp.lt.s32.totalorder %s14, 3
      %p155 = pnand %p153, %p154
      %p156 = pneg %p155
      // Predicated region
      $region25: #{tpu_custom_call.1} parent=5 // pred_check
        _
      $region26: #{tpu_custom_call.1} parent=5 // pred_check_branch
        %158 = sbr.rel (%p155) target = $region28
      $region27: #{tpu_custom_call.1} parent=5 // pred_region
        %s159 = ssub.s32 %s14, 1
        %s160 = sand.u32 %s41, 1
        %s161 = scalar_lea.sflag [#allocation3], %s160
        %s162 = sand.u32 %s41, 1
        %s163 = smul.addr %s162, 2
        %s164 = scalar_lea.vmem [#allocation2], %s163
        // Predicated region
        $region29: #{tpu_custom_call.1} parent=27 // pred_check
          %p165 = pneg %p54
        $region30: #{tpu_custom_call.1} parent=27 // pred_check_branch
          %167 = sbr.rel (%p165) target = $region32
        $region31: #{tpu_custom_call.1} parent=27 // pred_region
          %168 = dma.done %s161, 32
        $region32: #{tpu_custom_call.1} parent=27 // pred_fallthru
          _
        %s169 = sand.u32 %s41, 1
        %s170 = scalar_lea.sflag [#allocation3], %s169
        %s171 = sand.u32 %s41, 1
        %s172 = smul.addr %s171, 2
        %s173 = scalar_lea.vmem [#allocation2], %s172
        %p174 = pneg %p54
        %p175 = pneg %p51
        %p176 = scmp.lt.s32.totalorder %s23, 1
        %s177 = scalar_select %p176, %s23, 1
        %s178 = scalar_lea.vmem %s1, %s177
        %p179 = pneg %p80
        %p180 = pneg %p77
        %p181 = pneg %p108
        %p182 = pneg %p105
        %s183 = sand.u32 %s95, 1
        %s184 = scalar_lea.sflag [#allocation4], %s183
        %s185 = sand.u32 %s95, 1
        %s186 = smul.addr %s185, 2
        %s187 = scalar_lea.vmem [#allocation5], %s186
        %p188 = scmp.lt.s32.totalorder %s23, 1
        %s189 = scalar_select %p188, %s23, 1
        %s190 = scalar_lea.vmem %s1, %s189
        %v191 = vld [vmem:[%s164] sm:$0x3]
        %v192 = vmul.f32 %v191, 5.656854
        %v193 = vld [vmem:[%s190] sm:$0x1]
        %v195 = vlaneseq
        %v196 = vshrl.u32 %v195, 7
        %v197 = vsub.s32 0, %v196
        %v198 = vrot.slane %v193, %v197
        %v200 = vadd.f32 %v192, %v198
        %201 = vst [vmem:[%s187] sm:$0x3] %v200
        %s202 = sand.u32 %s95, 1
        %s203 = scalar_lea.sflag [#allocation4], %s202
        %s204 = sand.u32 %s95, 1
        %s205 = smul.addr %s204, 2
        %s206 = scalar_lea.vmem [#allocation5], %s205
        // Predicated region
        $region33: #{tpu_custom_call.1} parent=27 // pred_check
          %p207 = pneg %p105
        $region34: #{tpu_custom_call.1} parent=27 // pred_check_branch
          %209 = sbr.rel (%p207) target = $region36
        $region35: #{tpu_custom_call.1} parent=27 // pred_region
          %s211 = ssub.s32 32, 32
          %212 = vsyncadd %s203, %s211
          %s213 = smul.addr %s24, 2
          %s214 = sadd.s32 %s23, %s213
          %s215 = smul.addr %s214, 32
          %s216 = scalar_lea.hbm %s2, %s215
          %s218 = sshll.u32 %s206, 4
          %s219 = int_to_ptr.vmem [resolvable:$true] %s218
          %221 = dma.vmem_to_hbm [thread:$0]  %s219, 32, %s216, %s203
        $region36: #{tpu_custom_call.1} parent=27 // pred_fallthru
          _
      $region28: #{tpu_custom_call.1} parent=5 // pred_fallthru
        _
      %p222 = scmp.le.s32.totalorder 2, %s14
      // Predicated region
      $region37: #{tpu_custom_call.1} parent=5 // pred_check
        %p223 = pneg %p222
      $region38: #{tpu_custom_call.1} parent=5 // pred_check_branch
        %225 = sbr.rel (%p223) target = $region40
      $region39: #{tpu_custom_call.1} parent=5 // pred_region
        %s226 = ssub.s32 %s14, 2
        // Predicated region
        $region41: #{tpu_custom_call.1} parent=39 // pred_check
          %p227 = pneg %p111
        $region42: #{tpu_custom_call.1} parent=39 // pred_check_branch
          %229 = sbr.rel (%p227) target = $region44
        $region43: #{tpu_custom_call.1} parent=39 // pred_region
          %s230 = sand.u32 %s96, 1
          %s231 = scalar_lea.sflag [#allocation4], %s230
          %s232 = sand.u32 %s96, 1
          %s233 = smul.addr %s232, 2
          %s234 = scalar_lea.vmem [#allocation5], %s233
          %235 = dma.done %s231, 32
        $region44: #{tpu_custom_call.1} parent=39 // pred_fallthru
          _
      $region40: #{tpu_custom_call.1} parent=5 // pred_fallthru
        _
    $region6: #{tpu_custom_call.1} parent=1 // loop_footer
      %s18 = sadd.s32 1, %s14
    $region7: #{tpu_custom_call.1} parent=1 // loop_footer_branch
      %13 = sbr.rel target = $region3
    $region8: #{tpu_custom_call.1} parent=1 // loop_exit
      _
    %236 = vsyncpa [#allocation3], 1
    %s237 = scalar_lea.sflag [#allocation3], 1
    %238 = vsyncpa %s237, 1
    %239 = vsyncpa [#allocation4], 1
    %s240 = scalar_lea.sflag [#allocation4], 1
    %241 = vsyncpa %s240, 1

</llo_original>
